<compile_context>
chip_gen: v5e
topology: v5e:2x2
jax: 0.10.0
libtpu: 0.0.40
codegen_flags: <defaults>
</compile_context>

<pallas_src>
import jax
import jax.numpy as jnp
from jax.experimental import pallas as pl
from jax.experimental.pallas import tpu as pltpu


def _round_up(x: int, m: int) -> int:
    return ((x + m - 1) // m) * m


def _vmem_ceiling_bytes() -> int:
    # ~75% of per-core VMEM; conservative 48 MiB fallback (v7x has 64 MiB/TC).
    try:
        cap = pltpu.get_tpu_info().vmem_capacity_bytes
        return int(0.75 * cap)
    except Exception:
        return 48 * 1024 * 1024


def _make_dep_feat_kernel(num_embeddings: int):
    V = num_embeddings

    def kernel(de_ref, f_ref, w_ref, out_ref):
        # de_ref : (T, 2)  int32    lane 0 = de1, lane 1 = de2
        # f_ref  : (T, 1)  float32  SDP flag
        # w_ref  : (K_pad, F_pad) float32 fused block-diag [w1 | w2 | flag] table
        # out_ref: (T, F_pad) float32  -> [a | b | f | 0...]
        T = de_ref.shape[0]
        K_pad = w_ref.shape[0]

        ids = jax.lax.broadcasted_iota(jnp.int32, (T, K_pad), 1)
        de1 = de_ref[:, 0:1]                                    # (T, 1)
        de2 = de_ref[:, 1:2]                                    # (T, 1)

        # Single concatenated selector: one-hot(de1) in cols [0, V),
        # one-hot(de2) in cols [V, 2V), flag value at col 2V; zeros elsewhere.
        sel = (ids == de1).astype(jnp.float32)
        sel = sel + (ids == de2 + V).astype(jnp.float32)
        sel = sel + (ids == 2 * V).astype(jnp.float32) * f_ref[...]

        # One MXU matmul per token tile -> full (a | b | f) feature block.
        out_ref[...] = jnp.dot(sel, w_ref[...], preferred_element_type=jnp.float32)

    return kernel


def dependency_distance_forward(de1, de2, f, w1, w2, *, tile_tokens=2048):
    """Pallas equivalent of dependency_distance.forward (eval mode)."""
    B, L = de1.shape
    V, E = w1.shape
    N = B * L
    feat = 2 * E + 1                         # output feature width (a | b | f)

    K_pad = _round_up(2 * V + 1, 128)        # contraction dim (lane-aligned)
    F_pad = _round_up(feat, 128)             # output dim (lane-aligned)

    # Large token tile (multiple of 256, same on all chip generations) to
    # amortize the fixed per-grid-step pipeline overhead.
    T = min(int(tile_tokens), _round_up(N, 256))
    T = max(256, (T // 256) * 256)
    N_pad = _round_up(N, T)
    num_tiles = N_pad // T

    # Merged index input (one DMA per step) + flag, sublane-major.
    de = jnp.stack(
        [de1.astype(jnp.int32).reshape(N), de2.astype(jnp.int32).reshape(N)], axis=1
    )                                                            # (N, 2)
    f_flat = f.astype(jnp.float32).reshape(N, 1)                 # (N, 1)
    if N_pad != N:
        # Padding rows use the padding index; their outputs are sliced off.
        de = jnp.pad(de, ((0, N_pad - N), (0, 0)), constant_values=V - 1)
        f_flat = jnp.pad(f_flat, ((0, N_pad - N), (0, 0)))

    # Fused block-diagonal table:
    #   rows [0,V)   -> w1 at cols [0,E)
    #   rows [V,2V)  -> w2 at cols [E,2E)
    #   row  2V      -> 1.0 at col 2E (flag passthrough)
    w_cat = jnp.zeros((K_pad, F_pad), jnp.float32)
    w_cat = w_cat.at[:V, :E].set(w1.astype(jnp.float32))
    w_cat = w_cat.at[V:2 * V, E:2 * E].set(w2.astype(jnp.float32))
    w_cat = w_cat.at[2 * V, 2 * E].set(1.0)

    # Explicit VMEM budget; leave headroom below the physical cap.
    table_bytes = K_pad * F_pad * 4
    est_vmem = (
        2 * (T * 2 * 4)              # de tiles (double-buffered)
        + 2 * (T * 4)                # flag tiles (double-buffered)
        + 2 * table_bytes            # resident table (default 2 buffers)
        + 2 * (T * F_pad * 4)        # output tiles (double-buffered)
        + (T * K_pad * 4)            # selector intermediate
    )
    vmem_ceiling = _vmem_ceiling_bytes()
    if est_vmem > vmem_ceiling:
        # TODO(synk): K-tiled accumulation / DMA-gather path for very large V.
        raise NotImplementedError(
            "embedding tables too large for the resident-VMEM one-hot path"
        )
    vmem_limit = int(min(max(2 * est_vmem, 32 * 1024 * 1024), vmem_ceiling))

    # Advisory cost estimate (single matmul per tile).
    flops = 2 * N_pad * K_pad * F_pad
    bytes_accessed = 4 * (N_pad * 2 + N_pad + K_pad * F_pad + N_pad * F_pad)

    emb = pl.pallas_call(
        _make_dep_feat_kernel(V),
        out_shape=jax.ShapeDtypeStruct((N_pad, F_pad), jnp.float32),
        grid_spec=pltpu.PrefetchScalarGridSpec(
            num_scalar_prefetch=0,
            grid=(num_tiles,),
            in_specs=[
                pl.BlockSpec((T, 2), lambda i: (i, 0)),          # merged de1|de2
                pl.BlockSpec((T, 1), lambda i: (i, 0)),          # SDP flag
                pl.BlockSpec((K_pad, F_pad), lambda i: (0, 0)),  # fused table (resident)
            ],
            out_specs=pl.BlockSpec((T, F_pad), lambda i: (i, 0)),
        ),
        compiler_params=pltpu.CompilerParams(
            # Token axis is fully independent -> shards across TCs on megacore
            # parts.  TODO(synk): use pltpu.CORE_PARALLEL here if a v7x profile
            # shows single-core occupancy.
            dimension_semantics=("parallel",),
            vmem_limit_bytes=vmem_limit,
        ),
        cost_estimate=pl.CostEstimate(
            flops=flops, transcendentals=0, bytes_accessed=bytes_accessed
        ),
    )(de, f_flat, w_cat)

    # Single contiguous de-pad slice + reshape (no wrapper-side concat).
    return emb[:N, :feat].reshape(B, L, feat)


def reference_forward(de1, de2, f, w1, w2):
    """Pure-JAX reference matching the PyTorch module (eval mode)."""
    a = w1[de1]                       # (B, L, E)
    b = w2[de2]                       # (B, L, E)
    f_us = f[..., None]               # (B, L, 1)
    return jnp.concatenate([a, b, f_us], axis=2)


if __name__ == "__main__":
    # Small shapes consistent with the module's forward signature.
    B = 2            # batch_size
    L = 8            # padded_sentence_length
    V = 16           # num_embeddings (distinct distances); padding_idx = V - 1
    E = 32           # embedding_size

    key = jax.random.PRNGKey(0)
    k1, k2, k3, k4, k5 = jax.random.split(key, 5)

    # Deterministic parameter init (PyTorch Embedding ~ N(0,1); zero padding row).
    w1 = jax.random.normal(k1, (V, E), dtype=jnp.float32)
    w2 = jax.random.normal(k2, (V, E), dtype=jnp.float32)
    w1 = w1.at[V - 1].set(0.0)
    w2 = w2.at[V - 1].set(0.0)

    # Inputs: integer distance indices (include padding indices) and SDP flag.
    de1 = jax.random.randint(k3, (B, L), 0, V, dtype=jnp.int32)
    de2 = jax.random.randint(k4, (B, L), 0, V, dtype=jnp.int32)
    f = (jax.random.uniform(k5, (B, L)) > 0.5).astype(jnp.float32)

    out = dependency_distance_forward(de1, de2, f, w1, w2)
    out = jax.block_until_ready(out)

    ref = reference_forward(de1, de2, f, w1, w2)
    assert out.shape == (B, L, 2 * E + 1), out.shape
    assert jnp.allclose(out, ref, atol=1e-5, rtol=1e-5), "mismatch vs reference"

    print("KERNEL_OK")
</pallas_src>

<mosaic_0001>
module attributes {stable_mosaic.version = 11 : i64} {
  func.func @kernel(%arg0: i32, %arg1: memref<256x2xi32, #tpu.memory_space<vmem>>, %arg2: memref<256x1xf32, #tpu.memory_space<vmem>>, %arg3: memref<128x128xf32, #tpu.memory_space<vmem>>, %arg4: memref<256x128xf32, #tpu.memory_space<vmem>>) attributes {dimension_semantics = [#tpu.dimension_semantics<parallel>], iteration_bounds = array<i64: 1>, scalar_prefetch = 0 : i64, scratch_operands = 0 : i64, tpu.core_type = #tpu.core_type<tc>, window_params = [{transform_indices = @transform_0, window_bounds = array<i64: 256, 2>}, {transform_indices = @transform_1, window_bounds = array<i64: 256, 1>}, {pipeline_mode = #tpu.pipeline_mode<synchronous>, transform_indices = @transform_2, window_bounds = array<i64: 128, 128>}, {transform_indices = @transform_3, window_bounds = array<i64: 256, 128>}]} {
    %0 = tpu.iota {dimensions = array<i32: 1>} : vector<256x128xi32>
    %c0 = arith.constant 0 : index
    %c0_0 = arith.constant 0 : index
    %1 = vector.load %arg1[%c0, %c0_0] : memref<256x2xi32, #tpu.memory_space<vmem>>, vector<256x1xi32>
    %c0_1 = arith.constant 0 : index
    %c1 = arith.constant 1 : index
    %2 = vector.load %arg1[%c0_1, %c1] : memref<256x2xi32, #tpu.memory_space<vmem>>, vector<256x1xi32>
    %3 = vector.broadcast %1 : vector<256x1xi32> to vector<256x128xi32>
    %4 = arith.cmpi eq, %0, %3 : vector<256x128xi32>
    %5 = arith.extui %4 : vector<256x128xi1> to vector<256x128xi32>
    %6 = arith.sitofp %5 : vector<256x128xi32> to vector<256x128xf32>
    %c16_i32 = arith.constant 16 : i32
    %7 = vector.broadcast %c16_i32 : i32 to vector<256x1xi32>
    %8 = arith.addi %2, %7 : vector<256x1xi32>
    %9 = vector.broadcast %8 : vector<256x1xi32> to vector<256x128xi32>
    %10 = arith.cmpi eq, %0, %9 : vector<256x128xi32>
    %11 = arith.extui %10 : vector<256x128xi1> to vector<256x128xi32>
    %12 = arith.sitofp %11 : vector<256x128xi32> to vector<256x128xf32>
    %13 = arith.addf %6, %12 : vector<256x128xf32>
    %c32_i32 = arith.constant 32 : i32
    %14 = vector.broadcast %c32_i32 : i32 to vector<256x128xi32>
    %15 = arith.cmpi eq, %0, %14 : vector<256x128xi32>
    %16 = arith.extui %15 : vector<256x128xi1> to vector<256x128xi32>
    %17 = arith.sitofp %16 : vector<256x128xi32> to vector<256x128xf32>
    %c0_2 = arith.constant 0 : index
    %c0_3 = arith.constant 0 : index
    %18 = vector.load %arg2[%c0_2, %c0_3] : memref<256x1xf32, #tpu.memory_space<vmem>>, vector<256x1xf32>
    %19 = vector.broadcast %18 : vector<256x1xf32> to vector<256x128xf32>
    %20 = arith.mulf %17, %19 : vector<256x128xf32>
    %21 = arith.addf %13, %20 : vector<256x128xf32>
    %c0_4 = arith.constant 0 : index
    %c0_5 = arith.constant 0 : index
    %22 = vector.load %arg3[%c0_4, %c0_5] : memref<128x128xf32, #tpu.memory_space<vmem>>, vector<128x128xf32>
    %cst = arith.constant dense<0.000000e+00> : vector<256x128xf32>
    %23 = tpu.matmul %21, %22, %cst {dimension_numbers = #tpu.dot_dimension_numbers<[1], [0], [0], [1], [0, 0, 1, 1], [], []>} : vector<256x128xf32>, vector<128x128xf32>, vector<256x128xf32> -> vector<256x128xf32>
    %c0_6 = arith.constant 0 : index
    %c0_7 = arith.constant 0 : index
    %24 = vector.load %arg4[%c0_6, %c0_7] : memref<256x128xf32, #tpu.memory_space<vmem>>, vector<256x128xf32>
    tpu.vector_store %arg4[%c0_6, %c0_7], %23 {strides = array<i32>} : memref<256x128xf32, #tpu.memory_space<vmem>>, vector<256x128xf32>,
    return
  }
  func.func @transform_0(%arg0: i32) -> (i32, i32) {
    %c0_i32 = arith.constant 0 : i32
    %c0_i32_0 = arith.constant 0 : i32
    return %arg0, %c0_i32 : i32, i32
  }
  func.func @transform_1(%arg0: i32) -> (i32, i32) {
    %c0_i32 = arith.constant 0 : i32
    %c0_i32_0 = arith.constant 0 : i32
    return %arg0, %c0_i32 : i32, i32
  }
  func.func @transform_2(%arg0: i32) -> (i32, i32) {
    %c0_i32 = arith.constant 0 : i32
    %c0_i32_0 = arith.constant 0 : i32
    %c0_i32_1 = arith.constant 0 : i32
    return %c0_i32, %c0_i32_0 : i32, i32
  }
  func.func @transform_3(%arg0: i32) -> (i32, i32) {
    %c0_i32 = arith.constant 0 : i32
    %c0_i32_0 = arith.constant 0 : i32
    return %arg0, %c0_i32 : i32, i32
  }
}

</mosaic_0001>

<llo_original>
// kernel: tpu_custom_call.1
$region0: #{tpu_custom_call.1}
  #allocation0 [shape = 'u32[]', space=smem, size = 0x4, offset = 0x4, fixed_abs, tag = 'smem constant byte address 0x4 - core index']
  #allocation1 [shape = 'u32[72,128]{1,0:T(1,128)}', space=vmem, size = 0x9000, scoped, tag = 'internal scratch']
  %s0 = inlined_call_operand.vmem [shape: s32[256,2], index: 0, kind: input, shape index: {}]
  %s1 = inlined_call_operand.vmem [shape: f32[256,1], index: 1, kind: input, shape index: {}]
  %s2 = inlined_call_operand.vmem [shape: f32[128,128], index: 2, kind: input, shape index: {}]
  %s3 = inlined_call_operand.hbm [shape: f32[256,128], index: 3, kind: output, shape index: {}]
  %s4 = sld [smem:[#allocation0]]
  $region22: #{tpu_custom_call.1} parent=0
    _
  %s6 = ssub.s32 1, %s4
  %s7 = scalar_select 0, %s6, %s4
  $region1: #{tpu_custom_call.1} parent=0
    #allocation2 [shape = 'u8[131072]{0}', space=vmem, size = 0x20000, scoped, tag = 'output window, operand 0, single buffered']
    #allocation3 [shape = 's32[1]{0}', space=sflag, size = 0x4, scoped, tag = 'scoped memory for tpu_custom_call.1']
    %8 = vsyncpa [#allocation3], 0
    // Predicated region
    $region2: #{tpu_custom_call.1} parent=1 // pred_check
      _
    $region3: #{tpu_custom_call.1} parent=1 // pred_check_branch
      %10 = sbr.rel (0) target = $region5
    $region4: #{tpu_custom_call.1} parent=1 // pred_region
      _
    $region5: #{tpu_custom_call.1} parent=1 // pred_fallthru
      _
    // Predicated region
    $region6: #{tpu_custom_call.1} parent=1 // pred_check
      _
    $region7: #{tpu_custom_call.1} parent=1 // pred_check_branch
      %12 = sbr.rel (0) target = $region9
    $region8: #{tpu_custom_call.1} parent=1 // pred_region
      _
    $region9: #{tpu_custom_call.1} parent=1 // pred_fallthru
      _
    // Predicated region
    $region10: #{tpu_custom_call.1} parent=1 // pred_check
      _
    $region11: #{tpu_custom_call.1} parent=1 // pred_check_branch
      %14 = sbr.rel (0) target = $region13
    $region12: #{tpu_custom_call.1} parent=1 // pred_region
      _
    $region13: #{tpu_custom_call.1} parent=1 // pred_fallthru
      _
    %v15 = vlaneseq
    %v16 = vand.u32 %v15, 127
    %v17 = vld [vmem:[%s0] sm:$0xff]
    %v18 = vld [vmem:[%s0 + $0x8] sm:$0xff]
    %v19 = vld [vmem:[%s0 + $0x10] sm:$0xff]
    %v20 = vld [vmem:[%s0 + $0x18] sm:$0xff]
    %v21 = vld [vmem:[%s0 + $0x20] sm:$0xff]
    %v22 = vld [vmem:[%s0 + $0x28] sm:$0xff]
    %v23 = vld [vmem:[%s0 + $0x30] sm:$0xff]
    %v24 = vld [vmem:[%s0 + $0x38] sm:$0xff]
    %v25 = vld [vmem:[%s0 + $0x40] sm:$0xff]
    %v26 = vld [vmem:[%s0 + $0x48] sm:$0xff]
    %v27 = vld [vmem:[%s0 + $0x50] sm:$0xff]
    %v28 = vld [vmem:[%s0 + $0x58] sm:$0xff]
    %v29 = vld [vmem:[%s0 + $0x60] sm:$0xff]
    %v30 = vld [vmem:[%s0 + $0x68] sm:$0xff]
    %v31 = vld [vmem:[%s0 + $0x70] sm:$0xff]
    %v32 = vld [vmem:[%s0 + $0x78] sm:$0xff]
    %v33 = vld [vmem:[%s0 + $0x80] sm:$0xff]
    %v34 = vld [vmem:[%s0 + $0x88] sm:$0xff]
    %v35 = vld [vmem:[%s0 + $0x90] sm:$0xff]
    %v36 = vld [vmem:[%s0 + $0x98] sm:$0xff]
    %v37 = vld [vmem:[%s0 + $0xa0] sm:$0xff]
    %v38 = vld [vmem:[%s0 + $0xa8] sm:$0xff]
    %v39 = vld [vmem:[%s0 + $0xb0] sm:$0xff]
    %v40 = vld [vmem:[%s0 + $0xb8] sm:$0xff]
    %v41 = vld [vmem:[%s0 + $0xc0] sm:$0xff]
    %v42 = vld [vmem:[%s0 + $0xc8] sm:$0xff]
    %v43 = vld [vmem:[%s0 + $0xd0] sm:$0xff]
    %v44 = vld [vmem:[%s0 + $0xd8] sm:$0xff]
    %v45 = vld [vmem:[%s0 + $0xe0] sm:$0xff]
    %v46 = vld [vmem:[%s0 + $0xe8] sm:$0xff]
    %v47 = vld [vmem:[%s0 + $0xf0] sm:$0xff]
    %v48 = vld [vmem:[%s0 + $0xf8] sm:$0xff]
    %49 = vset.pattern.permute.xlu0 0
    %50 = vperm.xlu0 %49, %v17
    %v51 = vpop.permute.xlu0 %50
    %52 = vset.pattern.permute.xlu0 0
    %53 = vperm.xlu0 %52, %v18
    %v54 = vpop.permute.xlu0 %53
    %55 = vset.pattern.permute.xlu0 0
    %56 = vperm.xlu0 %55, %v19
    %v57 = vpop.permute.xlu0 %56
    %58 = vset.pattern.permute.xlu0 0
    %59 = vperm.xlu0 %58, %v20
    %v60 = vpop.permute.xlu0 %59
    %61 = vset.pattern.permute.xlu0 0
    %62 = vperm.xlu0 %61, %v21
    %v63 = vpop.permute.xlu0 %62
    %64 = vset.pattern.permute.xlu0 0
    %65 = vperm.xlu0 %64, %v22
    %v66 = vpop.permute.xlu0 %65
    %67 = vset.pattern.permute.xlu0 0
    %68 = vperm.xlu0 %67, %v23
    %v69 = vpop.permute.xlu0 %68
    %70 = vset.pattern.permute.xlu0 0
    %71 = vperm.xlu0 %70, %v24
    %v72 = vpop.permute.xlu0 %71
    %73 = vset.pattern.permute.xlu0 0
    %74 = vperm.xlu0 %73, %v25
    %v75 = vpop.permute.xlu0 %74
    %76 = vset.pattern.permute.xlu0 0
    %77 = vperm.xlu0 %76, %v26
    %v78 = vpop.permute.xlu0 %77
    %79 = vset.pattern.permute.xlu0 0
    %80 = vperm.xlu0 %79, %v27
    %v81 = vpop.permute.xlu0 %80
    %82 = vset.pattern.permute.xlu0 0
    %83 = vperm.xlu0 %82, %v28
    %v84 = vpop.permute.xlu0 %83
    %85 = vset.pattern.permute.xlu0 0
    %86 = vperm.xlu0 %85, %v29
    %v87 = vpop.permute.xlu0 %86
    %88 = vset.pattern.permute.xlu0 0
    %89 = vperm.xlu0 %88, %v30
    %v90 = vpop.permute.xlu0 %89
    %91 = vset.pattern.permute.xlu0 0
    %92 = vperm.xlu0 %91, %v31
    %v93 = vpop.permute.xlu0 %92
    %94 = vset.pattern.permute.xlu0 0
    %95 = vperm.xlu0 %94, %v32
    %v96 = vpop.permute.xlu0 %95
    %97 = vset.pattern.permute.xlu0 0
    %98 = vperm.xlu0 %97, %v33
    %v99 = vpop.permute.xlu0 %98
    %100 = vset.pattern.permute.xlu0 0
    %101 = vperm.xlu0 %100, %v34
    %v102 = vpop.permute.xlu0 %101
    %103 = vset.pattern.permute.xlu0 0
    %104 = vperm.xlu0 %103, %v35
    %v105 = vpop.permute.xlu0 %104
    %106 = vset.pattern.permute.xlu0 0
    %107 = vperm.xlu0 %106, %v36
    %v108 = vpop.permute.xlu0 %107
    %109 = vset.pattern.permute.xlu0 0
    %110 = vperm.xlu0 %109, %v37
    %v111 = vpop.permute.xlu0 %110
    %112 = vset.pattern.permute.xlu0 0
    %113 = vperm.xlu0 %112, %v38
    %v114 = vpop.permute.xlu0 %113
    %115 = vset.pattern.permute.xlu0 0
    %116 = vperm.xlu0 %115, %v39
    %v117 = vpop.permute.xlu0 %116
    %118 = vset.pattern.permute.xlu0 0
    %119 = vperm.xlu0 %118, %v40
    %v120 = vpop.permute.xlu0 %119
    %121 = vset.pattern.permute.xlu0 0
    %122 = vperm.xlu0 %121, %v41
    %v123 = vpop.permute.xlu0 %122
    %124 = vset.pattern.permute.xlu0 0
    %125 = vperm.xlu0 %124, %v42
    %v126 = vpop.permute.xlu0 %125
    %127 = vset.pattern.permute.xlu0 0
    %128 = vperm.xlu0 %127, %v43
    %v129 = vpop.permute.xlu0 %128
    %130 = vset.pattern.permute.xlu0 0
    %131 = vperm.xlu0 %130, %v44
    %v132 = vpop.permute.xlu0 %131
    %133 = vset.pattern.permute.xlu0 0
    %134 = vperm.xlu0 %133, %v45
    %v135 = vpop.permute.xlu0 %134
    %136 = vset.pattern.permute.xlu0 0
    %137 = vperm.xlu0 %136, %v46
    %v138 = vpop.permute.xlu0 %137
    %139 = vset.pattern.permute.xlu0 0
    %140 = vperm.xlu0 %139, %v47
    %v141 = vpop.permute.xlu0 %140
    %142 = vset.pattern.permute.xlu0 0
    %143 = vperm.xlu0 %142, %v48
    %v144 = vpop.permute.xlu0 %143
    %vm145 = vcmp.eq.s32.totalorder %v16, %v51
    %vm146 = vcmp.eq.s32.totalorder %v16, %v54
    %vm147 = vcmp.eq.s32.totalorder %v16, %v57
    %vm148 = vcmp.eq.s32.totalorder %v16, %v60
    %vm149 = vcmp.eq.s32.totalorder %v16, %v63
    %vm150 = vcmp.eq.s32.totalorder %v16, %v66
    %vm151 = vcmp.eq.s32.totalorder %v16, %v69
    %vm152 = vcmp.eq.s32.totalorder %v16, %v72
    %vm153 = vcmp.eq.s32.totalorder %v16, %v75
    %vm154 = vcmp.eq.s32.totalorder %v16, %v78
    %vm155 = vcmp.eq.s32.totalorder %v16, %v81
    %vm156 = vcmp.eq.s32.totalorder %v16, %v84
    %vm157 = vcmp.eq.s32.totalorder %v16, %v87
    %vm158 = vcmp.eq.s32.totalorder %v16, %v90
    %vm159 = vcmp.eq.s32.totalorder %v16, %v93
    %vm160 = vcmp.eq.s32.totalorder %v16, %v96
    %vm161 = vcmp.eq.s32.totalorder %v16, %v99
    %vm162 = vcmp.eq.s32.totalorder %v16, %v102
    %vm163 = vcmp.eq.s32.totalorder %v16, %v105
    %vm164 = vcmp.eq.s32.totalorder %v16, %v108
    %vm165 = vcmp.eq.s32.totalorder %v16, %v111
    %vm166 = vcmp.eq.s32.totalorder %v16, %v114
    %vm167 = vcmp.eq.s32.totalorder %v16, %v117
    %vm168 = vcmp.eq.s32.totalorder %v16, %v120
    %vm169 = vcmp.eq.s32.totalorder %v16, %v123
    %vm170 = vcmp.eq.s32.totalorder %v16, %v126
    %vm171 = vcmp.eq.s32.totalorder %v16, %v129
    %vm172 = vcmp.eq.s32.totalorder %v16, %v132
    %vm173 = vcmp.eq.s32.totalorder %v16, %v135
    %vm174 = vcmp.eq.s32.totalorder %v16, %v138
    %vm175 = vcmp.eq.s32.totalorder %v16, %v141
    %vm176 = vcmp.eq.s32.totalorder %v16, %v144
    %v177 = vsel %vm145, 1, 0
    %v178 = vsel %vm146, 1, 0
    %v179 = vsel %vm147, 1, 0
    %v180 = vsel %vm148, 1, 0
    %v181 = vsel %vm149, 1, 0
    %v182 = vsel %vm150, 1, 0
    %v183 = vsel %vm151, 1, 0
    %v184 = vsel %vm152, 1, 0
    %v185 = vsel %vm153, 1, 0
    %v186 = vsel %vm154, 1, 0
    %v187 = vsel %vm155, 1, 0
    %v188 = vsel %vm156, 1, 0
    %v189 = vsel %vm157, 1, 0
    %v190 = vsel %vm158, 1, 0
    %v191 = vsel %vm159, 1, 0
    %v192 = vsel %vm160, 1, 0
    %v193 = vsel %vm161, 1, 0
    %v194 = vsel %vm162, 1, 0
    %v195 = vsel %vm163, 1, 0
    %v196 = vsel %vm164, 1, 0
    %v197 = vsel %vm165, 1, 0
    %v198 = vsel %vm166, 1, 0
    %v199 = vsel %vm167, 1, 0
    %v200 = vsel %vm168, 1, 0
    %v201 = vsel %vm169, 1, 0
    %v202 = vsel %vm170, 1, 0
    %v203 = vsel %vm171, 1, 0
    %v204 = vsel %vm172, 1, 0
    %v205 = vsel %vm173, 1, 0
    %v206 = vsel %vm174, 1, 0
    %v207 = vsel %vm175, 1, 0
    %v208 = vsel %vm176, 1, 0
    %v209 = vcvt.s32.f32 %v177
    %v210 = vcvt.s32.f32 %v178
    %v211 = vcvt.s32.f32 %v179
    %v212 = vcvt.s32.f32 %v180
    %v213 = vcvt.s32.f32 %v181
    %v214 = vcvt.s32.f32 %v182
    %v215 = vcvt.s32.f32 %v183
    %v216 = vcvt.s32.f32 %v184
    %v217 = vcvt.s32.f32 %v185
    %v218 = vcvt.s32.f32 %v186
    %v219 = vcvt.s32.f32 %v187
    %v220 = vcvt.s32.f32 %v188
    %v221 = vcvt.s32.f32 %v189
    %v222 = vcvt.s32.f32 %v190
    %v223 = vcvt.s32.f32 %v191
    %v224 = vcvt.s32.f32 %v192
    %v225 = vcvt.s32.f32 %v193
    %v226 = vcvt.s32.f32 %v194
    %v227 = vcvt.s32.f32 %v195
    %v228 = vcvt.s32.f32 %v196
    %v229 = vcvt.s32.f32 %v197
    %v230 = vcvt.s32.f32 %v198
    %v231 = vcvt.s32.f32 %v199
    %v232 = vcvt.s32.f32 %v200
    %v233 = vcvt.s32.f32 %v201
    %v234 = vcvt.s32.f32 %v202
    %v235 = vcvt.s32.f32 %v203
    %v236 = vcvt.s32.f32 %v204
    %v237 = vcvt.s32.f32 %v205
    %v238 = vcvt.s32.f32 %v206
    %v239 = vcvt.s32.f32 %v207
    %v240 = vcvt.s32.f32 %v208
    %v241 = vadd.s32 %v17, 16
    %v242 = vadd.s32 %v18, 16
    %v243 = vadd.s32 %v19, 16
    %v244 = vadd.s32 %v20, 16
    %v245 = vadd.s32 %v21, 16
    %v246 = vadd.s32 %v22, 16
    %v247 = vadd.s32 %v23, 16
    %v248 = vadd.s32 %v24, 16
    %v249 = vadd.s32 %v25, 16
    %v250 = vadd.s32 %v26, 16
    %v251 = vadd.s32 %v27, 16
    %v252 = vadd.s32 %v28, 16
    %v253 = vadd.s32 %v29, 16
    %v254 = vadd.s32 %v30, 16
    %v255 = vadd.s32 %v31, 16
    %v256 = vadd.s32 %v32, 16
    %v257 = vadd.s32 %v33, 16
    %v258 = vadd.s32 %v34, 16
    %v259 = vadd.s32 %v35, 16
    %v260 = vadd.s32 %v36, 16
    %v261 = vadd.s32 %v37, 16
    %v262 = vadd.s32 %v38, 16
    %v263 = vadd.s32 %v39, 16
    %v264 = vadd.s32 %v40, 16
    %v265 = vadd.s32 %v41, 16
    %v266 = vadd.s32 %v42, 16
    %v267 = vadd.s32 %v43, 16
    %v268 = vadd.s32 %v44, 16
    %v269 = vadd.s32 %v45, 16
    %v270 = vadd.s32 %v46, 16
    %v271 = vadd.s32 %v47, 16
    %v272 = vadd.s32 %v48, 16
    %273 = vset.pattern.permute.xlu0 1
    %274 = vperm.xlu0 %273, %v241
    %v275 = vpop.permute.xlu0 %274
    %276 = vset.pattern.permute.xlu0 1
    %277 = vperm.xlu0 %276, %v242
    %v278 = vpop.permute.xlu0 %277
    %279 = vset.pattern.permute.xlu0 1
    %280 = vperm.xlu0 %279, %v243
    %v281 = vpop.permute.xlu0 %280
    %282 = vset.pattern.permute.xlu0 1
    %283 = vperm.xlu0 %282, %v244
    %v284 = vpop.permute.xlu0 %283
    %285 = vset.pattern.permute.xlu0 1
    %286 = vperm.xlu0 %285, %v245
    %v287 = vpop.permute.xlu0 %286
    %288 = vset.pattern.permute.xlu0 1
    %289 = vperm.xlu0 %288, %v246
    %v290 = vpop.permute.xlu0 %289
    %291 = vset.pattern.permute.xlu0 1
    %292 = vperm.xlu0 %291, %v247
    %v293 = vpop.permute.xlu0 %292
    %294 = vset.pattern.permute.xlu0 1
    %295 = vperm.xlu0 %294, %v248
    %v296 = vpop.permute.xlu0 %295
    %297 = vset.pattern.permute.xlu0 1
    %298 = vperm.xlu0 %297, %v249
    %v299 = vpop.permute.xlu0 %298
    %300 = vset.pattern.permute.xlu0 1
    %301 = vperm.xlu0 %300, %v250
    %v302 = vpop.permute.xlu0 %301
    %303 = vset.pattern.permute.xlu0 1
    %304 = vperm.xlu0 %303, %v251
    %v305 = vpop.permute.xlu0 %304
    %306 = vset.pattern.permute.xlu0 1
    %307 = vperm.xlu0 %306, %v252
    %v308 = vpop.permute.xlu0 %307
    %309 = vset.pattern.permute.xlu0 1
    %310 = vperm.xlu0 %309, %v253
    %v311 = vpop.permute.xlu0 %310
    %312 = vset.pattern.permute.xlu0 1
    %313 = vperm.xlu0 %312, %v254
    %v314 = vpop.permute.xlu0 %313
    %315 = vset.pattern.permute.xlu0 1
    %316 = vperm.xlu0 %315, %v255
    %v317 = vpop.permute.xlu0 %316
    %318 = vset.pattern.permute.xlu0 1
    %319 = vperm.xlu0 %318, %v256
    %v320 = vpop.permute.xlu0 %319
    %321 = vset.pattern.permute.xlu0 1
    %322 = vperm.xlu0 %321, %v257
    %v323 = vpop.permute.xlu0 %322
    %324 = vset.pattern.permute.xlu0 1
    %325 = vperm.xlu0 %324, %v258
    %v326 = vpop.permute.xlu0 %325
    %327 = vset.pattern.permute.xlu0 1
    %328 = vperm.xlu0 %327, %v259
    %v329 = vpop.permute.xlu0 %328
    %330 = vset.pattern.permute.xlu0 1
    %331 = vperm.xlu0 %330, %v260
    %v332 = vpop.permute.xlu0 %331
    %333 = vset.pattern.permute.xlu0 1
    %334 = vperm.xlu0 %333, %v261
    %v335 = vpop.permute.xlu0 %334
    %336 = vset.pattern.permute.xlu0 1
    %337 = vperm.xlu0 %336, %v262
    %v338 = vpop.permute.xlu0 %337
    %339 = vset.pattern.permute.xlu0 1
    %340 = vperm.xlu0 %339, %v263
    %v341 = vpop.permute.xlu0 %340
    %342 = vset.pattern.permute.xlu0 1
    %343 = vperm.xlu0 %342, %v264
    %v344 = vpop.permute.xlu0 %343
    %345 = vset.pattern.permute.xlu0 1
    %346 = vperm.xlu0 %345, %v265
    %v347 = vpop.permute.xlu0 %346
    %348 = vset.pattern.permute.xlu0 1
    %349 = vperm.xlu0 %348, %v266
    %v350 = vpop.permute.xlu0 %349
    %351 = vset.pattern.permute.xlu0 1
    %352 = vperm.xlu0 %351, %v267
    %v353 = vpop.permute.xlu0 %352
    %354 = vset.pattern.permute.xlu0 1
    %355 = vperm.xlu0 %354, %v268
    %v356 = vpop.permute.xlu0 %355
    %357 = vset.pattern.permute.xlu0 1
    %358 = vperm.xlu0 %357, %v269
    %v359 = vpop.permute.xlu0 %358
    %360 = vset.pattern.permute.xlu0 1
    %361 = vperm.xlu0 %360, %v270
    %v362 = vpop.permute.xlu0 %361
    %363 = vset.pattern.permute.xlu0 1
    %364 = vperm.xlu0 %363, %v271
    %v365 = vpop.permute.xlu0 %364
    %366 = vset.pattern.permute.xlu0 1
    %367 = vperm.xlu0 %366, %v272
    %v368 = vpop.permute.xlu0 %367
    %vm369 = vcmp.eq.s32.totalorder %v16, %v275
    %vm370 = vcmp.eq.s32.totalorder %v16, %v278
    %vm371 = vcmp.eq.s32.totalorder %v16, %v281
    %vm372 = vcmp.eq.s32.totalorder %v16, %v284
    %vm373 = vcmp.eq.s32.totalorder %v16, %v287
    %vm374 = vcmp.eq.s32.totalorder %v16, %v290
    %vm375 = vcmp.eq.s32.totalorder %v16, %v293
    %vm376 = vcmp.eq.s32.totalorder %v16, %v296
    %vm377 = vcmp.eq.s32.totalorder %v16, %v299
    %vm378 = vcmp.eq.s32.totalorder %v16, %v302
    %vm379 = vcmp.eq.s32.totalorder %v16, %v305
    %vm380 = vcmp.eq.s32.totalorder %v16, %v308
    %vm381 = vcmp.eq.s32.totalorder %v16, %v311
    %vm382 = vcmp.eq.s32.totalorder %v16, %v314
    %vm383 = vcmp.eq.s32.totalorder %v16, %v317
    %vm384 = vcmp.eq.s32.totalorder %v16, %v320
    %vm385 = vcmp.eq.s32.totalorder %v16, %v323
    %vm386 = vcmp.eq.s32.totalorder %v16, %v326
    %vm387 = vcmp.eq.s32.totalorder %v16, %v329
    %vm388 = vcmp.eq.s32.totalorder %v16, %v332
    %vm389 = vcmp.eq.s32.totalorder %v16, %v335
    %vm390 = vcmp.eq.s32.totalorder %v16, %v338
    %vm391 = vcmp.eq.s32.totalorder %v16, %v341
    %vm392 = vcmp.eq.s32.totalorder %v16, %v344
    %vm393 = vcmp.eq.s32.totalorder %v16, %v347
    %vm394 = vcmp.eq.s32.totalorder %v16, %v350
    %vm395 = vcmp.eq.s32.totalorder %v16, %v353
    %vm396 = vcmp.eq.s32.totalorder %v16, %v356
    %vm397 = vcmp.eq.s32.totalorder %v16, %v359
    %vm398 = vcmp.eq.s32.totalorder %v16, %v362
    %vm399 = vcmp.eq.s32.totalorder %v16, %v365
    %vm400 = vcmp.eq.s32.totalorder %v16, %v368
    %v401 = vsel %vm369, 1, 0
    %v402 = vsel %vm370, 1, 0
    %v403 = vsel %vm371, 1, 0
    %v404 = vsel %vm372, 1, 0
    %v405 = vsel %vm373, 1, 0
    %v406 = vsel %vm374, 1, 0
    %v407 = vsel %vm375, 1, 0
    %v408 = vsel %vm376, 1, 0
    %v409 = vsel %vm377, 1, 0
    %v410 = vsel %vm378, 1, 0
    %v411 = vsel %vm379, 1, 0
    %v412 = vsel %vm380, 1, 0
    %v413 = vsel %vm381, 1, 0
    %v414 = vsel %vm382, 1, 0
    %v415 = vsel %vm383, 1, 0
    %v416 = vsel %vm384, 1, 0
    %v417 = vsel %vm385, 1, 0
    %v418 = vsel %vm386, 1, 0
    %v419 = vsel %vm387, 1, 0
    %v420 = vsel %vm388, 1, 0
    %v421 = vsel %vm389, 1, 0
    %v422 = vsel %vm390, 1, 0
    %v423 = vsel %vm391, 1, 0
    %v424 = vsel %vm392, 1, 0
    %v425 = vsel %vm393, 1, 0
    %v426 = vsel %vm394, 1, 0
    %v427 = vsel %vm395, 1, 0
    %v428 = vsel %vm396, 1, 0
    %v429 = vsel %vm397, 1, 0
    %v430 = vsel %vm398, 1, 0
    %v431 = vsel %vm399, 1, 0
    %v432 = vsel %vm400, 1, 0
    %v433 = vcvt.s32.f32 %v401
    %v434 = vcvt.s32.f32 %v402
    %v435 = vcvt.s32.f32 %v403
    %v436 = vcvt.s32.f32 %v404
    %v437 = vcvt.s32.f32 %v405
    %v438 = vcvt.s32.f32 %v406
    %v439 = vcvt.s32.f32 %v407
    %v440 = vcvt.s32.f32 %v408
    %v441 = vcvt.s32.f32 %v409
    %v442 = vcvt.s32.f32 %v410
    %v443 = vcvt.s32.f32 %v411
    %v444 = vcvt.s32.f32 %v412
    %v445 = vcvt.s32.f32 %v413
    %v446 = vcvt.s32.f32 %v414
    %v447 = vcvt.s32.f32 %v415
    %v448 = vcvt.s32.f32 %v416
    %v449 = vcvt.s32.f32 %v417
    %v450 = vcvt.s32.f32 %v418
    %v451 = vcvt.s32.f32 %v419
    %v452 = vcvt.s32.f32 %v420
    %v453 = vcvt.s32.f32 %v421
    %v454 = vcvt.s32.f32 %v422
    %v455 = vcvt.s32.f32 %v423
    %v456 = vcvt.s32.f32 %v424
    %v457 = vcvt.s32.f32 %v425
    %v458 = vcvt.s32.f32 %v426
    %v459 = vcvt.s32.f32 %v427
    %v460 = vcvt.s32.f32 %v428
    %v461 = vcvt.s32.f32 %v429
    %v462 = vcvt.s32.f32 %v430
    %v463 = vcvt.s32.f32 %v431
    %v464 = vcvt.s32.f32 %v432
    %v465 = vadd.f32 %v209, %v433
    %v466 = vadd.f32 %v210, %v434
    %v467 = vadd.f32 %v211, %v435
    %v468 = vadd.f32 %v212, %v436
    %v469 = vadd.f32 %v213, %v437
    %v470 = vadd.f32 %v214, %v438
    %v471 = vadd.f32 %v215, %v439
    %v472 = vadd.f32 %v216, %v440
    %v473 = vadd.f32 %v217, %v441
    %v474 = vadd.f32 %v218, %v442
    %v475 = vadd.f32 %v219, %v443
    %v476 = vadd.f32 %v220, %v444
    %v477 = vadd.f32 %v221, %v445
    %v478 = vadd.f32 %v222, %v446
    %v479 = vadd.f32 %v223, %v447
    %v480 = vadd.f32 %v224, %v448
    %v481 = vadd.f32 %v225, %v449
    %v482 = vadd.f32 %v226, %v450
    %v483 = vadd.f32 %v227, %v451
    %v484 = vadd.f32 %v228, %v452
    %v485 = vadd.f32 %v229, %v453
    %v486 = vadd.f32 %v230, %v454
    %v487 = vadd.f32 %v231, %v455
    %v488 = vadd.f32 %v232, %v456
    %v489 = vadd.f32 %v233, %v457
    %v490 = vadd.f32 %v234, %v458
    %v491 = vadd.f32 %v235, %v459
    %v492 = vadd.f32 %v236, %v460
    %v493 = vadd.f32 %v237, %v461
    %v494 = vadd.f32 %v238, %v462
    %v495 = vadd.f32 %v239, %v463
    %v496 = vadd.f32 %v240, %v464
    %vm497 = vcmp.eq.s32.totalorder %v16, 32
    %v498 = vsel %vm497, 1, 0
    %v499 = vcvt.s32.f32 %v498
    %v500 = vld [vmem:[%s1] sm:$0xff]
    %v501 = vld [vmem:[%s1 + $0x8] sm:$0xff]
    %v502 = vld [vmem:[%s1 + $0x10] sm:$0xff]
    %v503 = vld [vmem:[%s1 + $0x18] sm:$0xff]
    %v504 = vld [vmem:[%s1 + $0x20] sm:$0xff]
    %v505 = vld [vmem:[%s1 + $0x28] sm:$0xff]
    %v506 = vld [vmem:[%s1 + $0x30] sm:$0xff]
    %v507 = vld [vmem:[%s1 + $0x38] sm:$0xff]
    %v508 = vld [vmem:[%s1 + $0x40] sm:$0xff]
    %v509 = vld [vmem:[%s1 + $0x48] sm:$0xff]
    %v510 = vld [vmem:[%s1 + $0x50] sm:$0xff]
    %v511 = vld [vmem:[%s1 + $0x58] sm:$0xff]
    %v512 = vld [vmem:[%s1 + $0x60] sm:$0xff]
    %v513 = vld [vmem:[%s1 + $0x68] sm:$0xff]
    %v514 = vld [vmem:[%s1 + $0x70] sm:$0xff]
    %v515 = vld [vmem:[%s1 + $0x78] sm:$0xff]
    %v516 = vld [vmem:[%s1 + $0x80] sm:$0xff]
    %v517 = vld [vmem:[%s1 + $0x88] sm:$0xff]
    %v518 = vld [vmem:[%s1 + $0x90] sm:$0xff]
    %v519 = vld [vmem:[%s1 + $0x98] sm:$0xff]
    %v520 = vld [vmem:[%s1 + $0xa0] sm:$0xff]
    %v521 = vld [vmem:[%s1 + $0xa8] sm:$0xff]
    %v522 = vld [vmem:[%s1 + $0xb0] sm:$0xff]
    %v523 = vld [vmem:[%s1 + $0xb8] sm:$0xff]
    %v524 = vld [vmem:[%s1 + $0xc0] sm:$0xff]
    %v525 = vld [vmem:[%s1 + $0xc8] sm:$0xff]
    %v526 = vld [vmem:[%s1 + $0xd0] sm:$0xff]
    %v527 = vld [vmem:[%s1 + $0xd8] sm:$0xff]
    %v528 = vld [vmem:[%s1 + $0xe0] sm:$0xff]
    %v529 = vld [vmem:[%s1 + $0xe8] sm:$0xff]
    %v530 = vld [vmem:[%s1 + $0xf0] sm:$0xff]
    %v531 = vld [vmem:[%s1 + $0xf8] sm:$0xff]
    %533 = vset.pattern.permute.xlu0 0
    %534 = vperm.xlu0 %533, %v500
    %v535 = vpop.permute.xlu0 %534
    %538 = vset.pattern.permute.xlu0 0
    %539 = vperm.xlu0 %538, %v501
    %v540 = vpop.permute.xlu0 %539
    %543 = vset.pattern.permute.xlu0 0
    %544 = vperm.xlu0 %543, %v502
    %v545 = vpop.permute.xlu0 %544
    %548 = vset.pattern.permute.xlu0 0
    %549 = vperm.xlu0 %548, %v503
    %v550 = vpop.permute.xlu0 %549
    %553 = vset.pattern.permute.xlu0 0
    %554 = vperm.xlu0 %553, %v504
    %v555 = vpop.permute.xlu0 %554
    %558 = vset.pattern.permute.xlu0 0
    %559 = vperm.xlu0 %558, %v505
    %v560 = vpop.permute.xlu0 %559
    %563 = vset.pattern.permute.xlu0 0
    %564 = vperm.xlu0 %563, %v506
    %v565 = vpop.permute.xlu0 %564
    %568 = vset.pattern.permute.xlu0 0
    %569 = vperm.xlu0 %568, %v507
    %v570 = vpop.permute.xlu0 %569
    %573 = vset.pattern.permute.xlu0 0
    %574 = vperm.xlu0 %573, %v508
    %v575 = vpop.permute.xlu0 %574
    %578 = vset.pattern.permute.xlu0 0
    %579 = vperm.xlu0 %578, %v509
    %v580 = vpop.permute.xlu0 %579
    %583 = vset.pattern.permute.xlu0 0
    %584 = vperm.xlu0 %583, %v510
    %v585 = vpop.permute.xlu0 %584
    %588 = vset.pattern.permute.xlu0 0
    %589 = vperm.xlu0 %588, %v511
    %v590 = vpop.permute.xlu0 %589
    %593 = vset.pattern.permute.xlu0 0
    %594 = vperm.xlu0 %593, %v512
    %v595 = vpop.permute.xlu0 %594
    %598 = vset.pattern.permute.xlu0 0
    %599 = vperm.xlu0 %598, %v513
    %v600 = vpop.permute.xlu0 %599
    %603 = vset.pattern.permute.xlu0 0
    %604 = vperm.xlu0 %603, %v514
    %v605 = vpop.permute.xlu0 %604
    %608 = vset.pattern.permute.xlu0 0
    %609 = vperm.xlu0 %608, %v515
    %v610 = vpop.permute.xlu0 %609
    %613 = vset.pattern.permute.xlu0 0
    %614 = vperm.xlu0 %613, %v516
    %v615 = vpop.permute.xlu0 %614
    %618 = vset.pattern.permute.xlu0 0
    %619 = vperm.xlu0 %618, %v517
    %v620 = vpop.permute.xlu0 %619
    %623 = vset.pattern.permute.xlu0 0
    %624 = vperm.xlu0 %623, %v518
    %v625 = vpop.permute.xlu0 %624
    %628 = vset.pattern.permute.xlu0 0
    %629 = vperm.xlu0 %628, %v519
    %v630 = vpop.permute.xlu0 %629
    %633 = vset.pattern.permute.xlu0 0
    %634 = vperm.xlu0 %633, %v520
    %v635 = vpop.permute.xlu0 %634
    %638 = vset.pattern.permute.xlu0 0
    %639 = vperm.xlu0 %638, %v521
    %v640 = vpop.permute.xlu0 %639
    %643 = vset.pattern.permute.xlu0 0
    %644 = vperm.xlu0 %643, %v522
    %v645 = vpop.permute.xlu0 %644
    %648 = vset.pattern.permute.xlu0 0
    %649 = vperm.xlu0 %648, %v523
    %v650 = vpop.permute.xlu0 %649
    %653 = vset.pattern.permute.xlu0 0
    %654 = vperm.xlu0 %653, %v524
    %v655 = vpop.permute.xlu0 %654
    %658 = vset.pattern.permute.xlu0 0
    %659 = vperm.xlu0 %658, %v525
    %v660 = vpop.permute.xlu0 %659
    %663 = vset.pattern.permute.xlu0 0
    %664 = vperm.xlu0 %663, %v526
    %v665 = vpop.permute.xlu0 %664
    %668 = vset.pattern.permute.xlu0 0
    %669 = vperm.xlu0 %668, %v527
    %v670 = vpop.permute.xlu0 %669
    %673 = vset.pattern.permute.xlu0 0
    %674 = vperm.xlu0 %673, %v528
    %v675 = vpop.permute.xlu0 %674
    %678 = vset.pattern.permute.xlu0 0
    %679 = vperm.xlu0 %678, %v529
    %v680 = vpop.permute.xlu0 %679
    %683 = vset.pattern.permute.xlu0 0
    %684 = vperm.xlu0 %683, %v530
    %v685 = vpop.permute.xlu0 %684
    %688 = vset.pattern.permute.xlu0 0
    %689 = vperm.xlu0 %688, %v531
    %v690 = vpop.permute.xlu0 %689
    %v692 = vmul.f32 %v499, %v535
    %v693 = vmul.f32 %v499, %v540
    %v694 = vmul.f32 %v499, %v545
    %v695 = vmul.f32 %v499, %v550
    %v696 = vmul.f32 %v499, %v555
    %v697 = vmul.f32 %v499, %v560
    %v698 = vmul.f32 %v499, %v565
    %v699 = vmul.f32 %v499, %v570
    %v700 = vmul.f32 %v499, %v575
    %v701 = vmul.f32 %v499, %v580
    %v702 = vmul.f32 %v499, %v585
    %v703 = vmul.f32 %v499, %v590
    %v704 = vmul.f32 %v499, %v595
    %v705 = vmul.f32 %v499, %v600
    %v706 = vmul.f32 %v499, %v605
    %v707 = vmul.f32 %v499, %v610
    %v708 = vmul.f32 %v499, %v615
    %v709 = vmul.f32 %v499, %v620
    %v710 = vmul.f32 %v499, %v625
    %v711 = vmul.f32 %v499, %v630
    %v712 = vmul.f32 %v499, %v635
    %v713 = vmul.f32 %v499, %v640
    %v714 = vmul.f32 %v499, %v645
    %v715 = vmul.f32 %v499, %v650
    %v716 = vmul.f32 %v499, %v655
    %v717 = vmul.f32 %v499, %v660
    %v718 = vmul.f32 %v499, %v665
    %v719 = vmul.f32 %v499, %v670
    %v720 = vmul.f32 %v499, %v675
    %v721 = vmul.f32 %v499, %v680
    %v722 = vmul.f32 %v499, %v685
    %v723 = vmul.f32 %v499, %v690
    %v724 = vadd.f32 %v465, %v692
    %v725 = vadd.f32 %v466, %v693
    %v726 = vadd.f32 %v467, %v694
    %v727 = vadd.f32 %v468, %v695
    %v728 = vadd.f32 %v469, %v696
    %v729 = vadd.f32 %v470, %v697
    %v730 = vadd.f32 %v471, %v698
    %v731 = vadd.f32 %v472, %v699
    %v732 = vadd.f32 %v473, %v700
    %v733 = vadd.f32 %v474, %v701
    %v734 = vadd.f32 %v475, %v702
    %v735 = vadd.f32 %v476, %v703
    %v736 = vadd.f32 %v477, %v704
    %v737 = vadd.f32 %v478, %v705
    %v738 = vadd.f32 %v479, %v706
    %v739 = vadd.f32 %v480, %v707
    %v740 = vadd.f32 %v481, %v708
    %v741 = vadd.f32 %v482, %v709
    %v742 = vadd.f32 %v483, %v710
    %v743 = vadd.f32 %v484, %v711
    %v744 = vadd.f32 %v485, %v712
    %v745 = vadd.f32 %v486, %v713
    %v746 = vadd.f32 %v487, %v714
    %v747 = vadd.f32 %v488, %v715
    %v748 = vadd.f32 %v489, %v716
    %v749 = vadd.f32 %v490, %v717
    %v750 = vadd.f32 %v491, %v718
    %v751 = vadd.f32 %v492, %v719
    %v752 = vadd.f32 %v493, %v720
    %v753 = vadd.f32 %v494, %v721
    %v754 = vadd.f32 %v495, %v722
    %v755 = vadd.f32 %v496, %v723
    %v756 = vld [vmem:[%s2] sm:$0xff]
    %v757 = vld [vmem:[%s2 + $0x8] sm:$0xff]
    %v758 = vld [vmem:[%s2 + $0x10] sm:$0xff]
    %v759 = vld [vmem:[%s2 + $0x18] sm:$0xff]
    %v760 = vld [vmem:[%s2 + $0x20] sm:$0xff]
    %v761 = vld [vmem:[%s2 + $0x28] sm:$0xff]
    %v762 = vld [vmem:[%s2 + $0x30] sm:$0xff]
    %v763 = vld [vmem:[%s2 + $0x38] sm:$0xff]
    %v764 = vld [vmem:[%s2 + $0x40] sm:$0xff]
    %v765 = vld [vmem:[%s2 + $0x48] sm:$0xff]
    %v766 = vld [vmem:[%s2 + $0x50] sm:$0xff]
    %v767 = vld [vmem:[%s2 + $0x58] sm:$0xff]
    %v768 = vld [vmem:[%s2 + $0x60] sm:$0xff]
    %v769 = vld [vmem:[%s2 + $0x68] sm:$0xff]
    %v770 = vld [vmem:[%s2 + $0x70] sm:$0xff]
    %v771 = vld [vmem:[%s2 + $0x78] sm:$0xff]
    %772 = vmatpush.msra.mxu0 %v771
    %773 = vmatpush.msra.mxu0 %v770
    %774 = vmatpush.msra.mxu0 %v769
    %775 = vmatpush.msra.mxu0 %v768
    %776 = vmatpush.msra.mxu0 %v767
    %777 = vmatpush.msra.mxu0 %v766
    %778 = vmatpush.msra.mxu0 %v765
    %779 = vmatpush.msra.mxu0 %v764
    %780 = vmatpush.msra.mxu0 %v763
    %781 = vmatpush.msra.mxu0 %v762
    %782 = vmatpush.msra.mxu0 %v761
    %783 = vmatpush.msra.mxu0 %v760
    %784 = vmatpush.msra.mxu0 %v759
    %785 = vmatpush.msra.mxu0 %v758
    %786 = vmatpush.msra.mxu0 %v757
    %787 = vmatpush.msra.mxu0 %v756
    %788 = vmatmul.f32.gmra.mxu0 %v724
    %v789 = vpop.f32.mrf.mxu0
    %v790 = vadd.f32 0.0, %v789
    %791 = vmatmul.f32.gmra.mxu0 %v725
    %v792 = vpop.f32.mrf.mxu0
    %v793 = vadd.f32 0.0, %v792
    %794 = vmatmul.f32.gmra.mxu0 %v726
    %v795 = vpop.f32.mrf.mxu0
    %v796 = vadd.f32 0.0, %v795
    %797 = vmatmul.f32.gmra.mxu0 %v727
    %v798 = vpop.f32.mrf.mxu0
    %v799 = vadd.f32 0.0, %v798
    %800 = vmatmul.f32.gmra.mxu0 %v728
    %v801 = vpop.f32.mrf.mxu0
    %v802 = vadd.f32 0.0, %v801
    %803 = vmatmul.f32.gmra.mxu0 %v729
    %v804 = vpop.f32.mrf.mxu0
    %v805 = vadd.f32 0.0, %v804
    %806 = vmatmul.f32.gmra.mxu0 %v730
    %v807 = vpop.f32.mrf.mxu0
    %v808 = vadd.f32 0.0, %v807
    %809 = vmatmul.f32.gmra.mxu0 %v731
    %v810 = vpop.f32.mrf.mxu0
    %v811 = vadd.f32 0.0, %v810
    %812 = vmatmul.f32.gmra.mxu0 %v732
    %v813 = vpop.f32.mrf.mxu0
    %v814 = vadd.f32 0.0, %v813
    %815 = vmatmul.f32.gmra.mxu0 %v733
    %v816 = vpop.f32.mrf.mxu0
    %v817 = vadd.f32 0.0, %v816
    %818 = vmatmul.f32.gmra.mxu0 %v734
    %v819 = vpop.f32.mrf.mxu0
    %v820 = vadd.f32 0.0, %v819
    %821 = vmatmul.f32.gmra.mxu0 %v735
    %v822 = vpop.f32.mrf.mxu0
    %v823 = vadd.f32 0.0, %v822
    %824 = vmatmul.f32.gmra.mxu0 %v736
    %v825 = vpop.f32.mrf.mxu0
    %v826 = vadd.f32 0.0, %v825
    %827 = vmatmul.f32.gmra.mxu0 %v737
    %v828 = vpop.f32.mrf.mxu0
    %v829 = vadd.f32 0.0, %v828
    %830 = vmatmul.f32.gmra.mxu0 %v738
    %v831 = vpop.f32.mrf.mxu0
    %v832 = vadd.f32 0.0, %v831
    %833 = vmatmul.f32.gmra.mxu0 %v739
    %v834 = vpop.f32.mrf.mxu0
    %v835 = vadd.f32 0.0, %v834
    %836 = vmatmul.f32.gmra.mxu0 %v740
    %v837 = vpop.f32.mrf.mxu0
    %v838 = vadd.f32 0.0, %v837
    %839 = vmatmul.f32.gmra.mxu0 %v741
    %v840 = vpop.f32.mrf.mxu0
    %v841 = vadd.f32 0.0, %v840
    %842 = vmatmul.f32.gmra.mxu0 %v742
    %v843 = vpop.f32.mrf.mxu0
    %v844 = vadd.f32 0.0, %v843
    %845 = vmatmul.f32.gmra.mxu0 %v743
    %v846 = vpop.f32.mrf.mxu0
    %v847 = vadd.f32 0.0, %v846
    %848 = vmatmul.f32.gmra.mxu0 %v744
    %v849 = vpop.f32.mrf.mxu0
    %v850 = vadd.f32 0.0, %v849
    %851 = vmatmul.f32.gmra.mxu0 %v745
    %v852 = vpop.f32.mrf.mxu0
    %v853 = vadd.f32 0.0, %v852
    %854 = vmatmul.f32.gmra.mxu0 %v746
    %v855 = vpop.f32.mrf.mxu0
    %v856 = vadd.f32 0.0, %v855
    %857 = vmatmul.f32.gmra.mxu0 %v747
    %v858 = vpop.f32.mrf.mxu0
    %v859 = vadd.f32 0.0, %v858
    %860 = vmatmul.f32.gmra.mxu0 %v748
    %v861 = vpop.f32.mrf.mxu0
    %v862 = vadd.f32 0.0, %v861
    %863 = vmatmul.f32.gmra.mxu0 %v749
    %v864 = vpop.f32.mrf.mxu0
    %v865 = vadd.f32 0.0, %v864
    %866 = vmatmul.f32.gmra.mxu0 %v750
    %v867 = vpop.f32.mrf.mxu0
    %v868 = vadd.f32 0.0, %v867
    %869 = vmatmul.f32.gmra.mxu0 %v751
    %v870 = vpop.f32.mrf.mxu0
    %v871 = vadd.f32 0.0, %v870
    %872 = vmatmul.f32.gmra.mxu0 %v752
    %v873 = vpop.f32.mrf.mxu0
    %v874 = vadd.f32 0.0, %v873
    %875 = vmatmul.f32.gmra.mxu0 %v753
    %v876 = vpop.f32.mrf.mxu0
    %v877 = vadd.f32 0.0, %v876
    %878 = vmatmul.f32.gmra.mxu0 %v754
    %v879 = vpop.f32.mrf.mxu0
    %v880 = vadd.f32 0.0, %v879
    %881 = vmatmul.f32.gmra.mxu0 %v755
    %v882 = vpop.f32.mrf.mxu0
    %v883 = vadd.f32 0.0, %v882
    %884 = vdwg.mxu0
    %885 = vst [vmem:[#allocation2] sm:$0xff] %v790
    %886 = vst [vmem:[#allocation2 + $0x8] sm:$0xff] %v793
    %887 = vst [vmem:[#allocation2 + $0x10] sm:$0xff] %v796
    %888 = vst [vmem:[#allocation2 + $0x18] sm:$0xff] %v799
    %889 = vst [vmem:[#allocation2 + $0x20] sm:$0xff] %v802
    %890 = vst [vmem:[#allocation2 + $0x28] sm:$0xff] %v805
    %891 = vst [vmem:[#allocation2 + $0x30] sm:$0xff] %v808
    %892 = vst [vmem:[#allocation2 + $0x38] sm:$0xff] %v811
    %893 = vst [vmem:[#allocation2 + $0x40] sm:$0xff] %v814
    %894 = vst [vmem:[#allocation2 + $0x48] sm:$0xff] %v817
    %895 = vst [vmem:[#allocation2 + $0x50] sm:$0xff] %v820
    %896 = vst [vmem:[#allocation2 + $0x58] sm:$0xff] %v823
    %897 = vst [vmem:[#allocation2 + $0x60] sm:$0xff] %v826
    %898 = vst [vmem:[#allocation2 + $0x68] sm:$0xff] %v829
    %899 = vst [vmem:[#allocation2 + $0x70] sm:$0xff] %v832
    %900 = vst [vmem:[#allocation2 + $0x78] sm:$0xff] %v835
    %901 = vst [vmem:[#allocation2 + $0x80] sm:$0xff] %v838
    %902 = vst [vmem:[#allocation2 + $0x88] sm:$0xff] %v841
    %903 = vst [vmem:[#allocation2 + $0x90] sm:$0xff] %v844
    %904 = vst [vmem:[#allocation2 + $0x98] sm:$0xff] %v847
    %905 = vst [vmem:[#allocation2 + $0xa0] sm:$0xff] %v850
    %906 = vst [vmem:[#allocation2 + $0xa8] sm:$0xff] %v853
    %907 = vst [vmem:[#allocation2 + $0xb0] sm:$0xff] %v856
    %908 = vst [vmem:[#allocation2 + $0xb8] sm:$0xff] %v859
    %909 = vst [vmem:[#allocation2 + $0xc0] sm:$0xff] %v862
    %910 = vst [vmem:[#allocation2 + $0xc8] sm:$0xff] %v865
    %911 = vst [vmem:[#allocation2 + $0xd0] sm:$0xff] %v868
    %912 = vst [vmem:[#allocation2 + $0xd8] sm:$0xff] %v871
    %913 = vst [vmem:[#allocation2 + $0xe0] sm:$0xff] %v874
    %914 = vst [vmem:[#allocation2 + $0xe8] sm:$0xff] %v877
    %915 = vst [vmem:[#allocation2 + $0xf0] sm:$0xff] %v880
    %916 = vst [vmem:[#allocation2 + $0xf8] sm:$0xff] %v883
    // Predicated region
    $region14: #{tpu_custom_call.1} parent=1 // pred_check
      _
    $region15: #{tpu_custom_call.1} parent=1 // pred_check_branch
      %918 = sbr.rel (0) target = $region17
    $region16: #{tpu_custom_call.1} parent=1 // pred_region
      %920 = vsyncadd [#allocation3], 0
      %s921 = sshll.u32 [#allocation2], 4
      %s922 = int_to_ptr.vmem [resolvable:$true] %s921
      %s923 = sshll.u32 %s3, 4
      %s924 = int_to_ptr.hbm [resolvable:$true] %s923
      %929 = dma.vmem_to_hbm [thread:$0]  %s922, 4096, %s924, [#allocation3], 128, 128, 8
    $region17: #{tpu_custom_call.1} parent=1 // pred_fallthru
      _
    // Predicated region
    $region18: #{tpu_custom_call.1} parent=1 // pred_check
      _
    $region19: #{tpu_custom_call.1} parent=1 // pred_check_branch
      %931 = sbr.rel (0) target = $region21
    $region20: #{tpu_custom_call.1} parent=1 // pred_region
      %933 = dma.done [#allocation3], 4096
    $region21: #{tpu_custom_call.1} parent=1 // pred_fallthru
      _
    %934 = vsyncpa [#allocation3], 1

</llo_original>
